<compile_context>
chip_gen: v6e
topology: v6e:2x2x1
jax: 0.10.0
libtpu: 0.0.40
codegen_flags: <defaults>
</compile_context>

<pallas_src>
import math

import jax
import jax.numpy as jnp
from jax.experimental import pallas as pl
from jax.experimental.pallas import tpu as pltpu

_SUB = 8            # f32 sublane quantum
_LANE = 128         # lane quantum
_MAX_TILE_ELEMS = 512 * 1024   # 2 MiB f32 per block per array


def _make_heat_kernel(sqrt_lam: float, c: float):
    # Plain Python floats: folded into the kernel at trace time.  (Closing over
    # jnp scalars creates "captured constants", which pallas_call rejects.)
    sqrt_lam = float(sqrt_lam)
    c = float(c)

    def kernel(t_ref, x_ref, u_ref):
        # NOTE: boundary blocks may contain garbage (possibly NaN/Inf) past the
        # valid edge of the array.  That garbage flows through sin/exp, but the
        # out-of-bounds portion of the output write-back is masked by Pallas,
        # so the visible result is unaffected.  Do NOT add block-wide
        # reductions here without revisiting this assumption.
        u = jnp.sin(sqrt_lam * x_ref[...]) * jnp.exp(c * t_ref[...])
        u_ref[...] = u.astype(u_ref.dtype)

    return kernel


def _lane_dense_width(total: int):
    """Largest lane-multiple dividing `total` (enables a copy-free (-1, tn) view)."""
    candidates = (4096, 2048, 1024, 512, 256, 128)
    for tn in candidates:                      # prefer >= 8 rows (full vregs)
        if total % tn == 0 and total // tn >= _SUB:
            return tn
    for tn in candidates:
        if total % tn == 0:
            return tn
    return None


def _pick_row_tile(rows: int, tn: int) -> int:
    """Row-tile: multiple of 8 (or the full row count), bounded by VMEM budget."""
    tm_cap = max(_SUB, ((_MAX_TILE_ELEMS // max(tn, 1)) // _SUB) * _SUB)
    if rows <= _SUB:
        return rows                            # block dim == full array dim is legal
    tm = min((rows // _SUB) * _SUB, tm_cap)
    # v7x has 2 TensorCores: keep >= 2 blocks on the "parallel" row axis
    # whenever there is enough work to split.
    if tm >= rows and rows >= 2 * _SUB:
        tm = ((pl.cdiv(rows, 2) + _SUB - 1) // _SUB) * _SUB
    return max(tm, _SUB)


def heat_conduction_forward(
    t: jax.Array,
    x: jax.Array,
    *,
    alpha: float = 1.0,
    length: float = 1.0,
    maxtime: float = 1.0,   # kept for parity with the PyTorch module (unused)
    n: int = 1,
    out_dtype=jnp.float32,  # bf16 allowed where tolerance permits (halves stores)
) -> jax.Array:
    """Exact solution of the 1D heat equation, computed in a Pallas TPU kernel."""
    alpha = abs(float(alpha))
    length = abs(float(length))
    n = abs(int(n))
    del maxtime
    sqrt_lam = n * math.pi / length
    c = -(sqrt_lam ** 2) * alpha               # fold constants on the host

    t = jnp.asarray(t, jnp.float32)
    x = jnp.asarray(x, jnp.float32)
    if t.shape != x.shape:
        # TODO(synk): broadcast-aware BlockSpecs (t per row tile, x per column
        # tile) would avoid materializing the broadcast and halve input HBM
        # traffic for meshgrid-style (P,1) x (1,N) inputs.
        t, x = jnp.broadcast_arrays(t, x)
    orig_shape = t.shape
    total = int(t.size)
    if total == 0:
        return jnp.zeros(orig_shape, out_dtype)

    # Prefer a copy-free, lane-dense (-1, tn) view of the raveled points.
    tn_view = _lane_dense_width(total)
    if tn_view is not None and total >= _SUB * _LANE:
        t2 = t.reshape(-1, tn_view)
        x2 = x.reshape(-1, tn_view)
    else:
        # Fallback: ragged 2-D view; Pallas masks boundary blocks (no pad/slice).
        last = orig_shape[-1] if len(orig_shape) >= 1 else 1
        t2 = t.reshape(1, -1) if t.ndim <= 1 else t.reshape(-1, last)
        x2 = x.reshape(1, -1) if x.ndim <= 1 else x.reshape(-1, last)

    M, N = t2.shape
    if N % _LANE == 0:
        tn_blk = min(N, 4096)                  # lane-dense, multiple of 128
    else:
        tn_blk = N                             # block dim == full dim (legal)
    tm_blk = _pick_row_tile(M, tn_blk)

    grid = (pl.cdiv(M, tm_blk), pl.cdiv(N, tn_blk))
    tile_spec = pl.BlockSpec((tm_blk, tn_blk), lambda i, j: (i, j))

    u = pl.pallas_call(
        _make_heat_kernel(sqrt_lam, c),
        out_shape=jax.ShapeDtypeStruct((M, N), out_dtype),
        grid=grid,
        in_specs=[tile_spec, tile_spec],
        out_specs=tile_spec,
        compiler_params=pltpu.CompilerParams(
            dimension_semantics=("parallel", "parallel"),
            vmem_limit_bytes=32 * 1024 * 1024,
        ),
        cost_estimate=pl.CostEstimate(
            flops=4 * total,
            transcendentals=2 * total,
            bytes_accessed=12 * total,
        ),
    )(t2, x2)

    return u.reshape(orig_shape)


if __name__ == "__main__":
    key = jax.random.PRNGKey(0)
    kt, kx = jax.random.split(key)

    # 1) Plain 2-D grid of (t, x) collocation points (lane-dense ravel path).
    M, N = 16, 256
    t = jax.random.uniform(kt, (M, N), dtype=jnp.float32, minval=0.0, maxval=1.0)
    x = jax.random.uniform(kx, (M, N), dtype=jnp.float32, minval=0.0, maxval=1.0)
    u = jax.block_until_ready(
        heat_conduction_forward(t, x, alpha=1.0, length=1.0, maxtime=1.0, n=1)
    )
    sl = math.pi
    u_ref = jnp.sin(sl * x) * jnp.exp(-(sl ** 2) * t)
    assert u.shape == (M, N) and u.dtype == jnp.float32
    assert jnp.allclose(u, u_ref, atol=1e-5, rtol=1e-5)

    # 2) PINN-style (P, 1) column inputs -> copy-free lane-dense layout.
    P = 1024
    t2 = jax.random.uniform(kt, (P, 1), dtype=jnp.float32, minval=0.0, maxval=1.0)
    x2 = jax.random.uniform(kx, (P, 1), dtype=jnp.float32, minval=0.0, maxval=2.0)
    u2 = jax.block_until_ready(
        heat_conduction_forward(t2, x2, alpha=0.5, length=2.0, maxtime=1.0, n=2)
    )
    sl2 = 2 * math.pi / 2.0
    u2_ref = jnp.sin(sl2 * x2) * jnp.exp(-(sl2 ** 2) * 0.5 * t2)
    assert u2.shape == (P, 1)
    assert jnp.allclose(u2, u2_ref, atol=1e-5, rtol=1e-5)

    # 3) Broadcastable + non-aligned shapes -> ragged boundary-block fallback.
    t3 = jax.random.uniform(kt, (10, 1), dtype=jnp.float32, minval=0.0, maxval=1.0)
    x3 = jax.random.uniform(kx, (1, 200), dtype=jnp.float32, minval=0.0, maxval=1.0)
    u3 = jax.block_until_ready(
        heat_conduction_forward(t3, x3, alpha=1.0, length=1.0, maxtime=1.0, n=3)
    )
    sl3 = 3 * math.pi
    u3_ref = jnp.sin(sl3 * x3) * jnp.exp(-(sl3 ** 2) * t3)
    assert u3.shape == (10, 200)
    assert jnp.allclose(u3, u3_ref, atol=1e-5, rtol=1e-5)

    print("KERNEL_OK")
</pallas_src>

<mosaic_0001>
module attributes {stable_mosaic.version = 11 : i64} {
  func.func @kernel(%arg0: i32, %arg1: i32, %arg2: memref<8x512xf32, #tpu.memory_space<vmem>>, %arg3: memref<8x512xf32, #tpu.memory_space<vmem>>, %arg4: memref<8x512xf32, #tpu.memory_space<vmem>>) attributes {dimension_semantics = [#tpu.dimension_semantics<parallel>, #tpu.dimension_semantics<parallel>], iteration_bounds = array<i64: 1, 1>, scalar_prefetch = 0 : i64, scratch_operands = 0 : i64, tpu.core_type = #tpu.core_type<tc>, window_params = [{transform_indices = @transform_0, window_bounds = array<i64: 8, 512>}, {transform_indices = @transform_1, window_bounds = array<i64: 8, 512>}, {transform_indices = @transform_2, window_bounds = array<i64: 8, 512>}]} {
    %c0 = arith.constant 0 : index
    %c0_0 = arith.constant 0 : index
    %0 = vector.load %arg3[%c0, %c0_0] : memref<8x512xf32, #tpu.memory_space<vmem>>, vector<8x512xf32>
    %cst = arith.constant 3.14159274 : f32
    %1 = vector.broadcast %cst : f32 to vector<8x512xf32>
    %2 = arith.mulf %1, %0 : vector<8x512xf32>
    %3 = math.sin %2 : vector<8x512xf32>
    %c0_1 = arith.constant 0 : index
    %c0_2 = arith.constant 0 : index
    %4 = vector.load %arg2[%c0_1, %c0_2] : memref<8x512xf32, #tpu.memory_space<vmem>>, vector<8x512xf32>
    %cst_3 = arith.constant -9.86960411 : f32
    %5 = vector.broadcast %cst_3 : f32 to vector<8x512xf32>
    %6 = arith.mulf %5, %4 : vector<8x512xf32>
    %7 = math.exp %6 : vector<8x512xf32>
    %8 = arith.mulf %3, %7 : vector<8x512xf32>
    %c0_4 = arith.constant 0 : index
    %c0_5 = arith.constant 0 : index
    %9 = vector.load %arg4[%c0_4, %c0_5] : memref<8x512xf32, #tpu.memory_space<vmem>>, vector<8x512xf32>
    tpu.vector_store %arg4[%c0_4, %c0_5], %8 {strides = array<i32>} : memref<8x512xf32, #tpu.memory_space<vmem>>, vector<8x512xf32>,
    return
  }
  func.func @transform_0(%arg0: i32, %arg1: i32) -> (i32, i32) {
    %c0_i32 = arith.constant 0 : i32
    return %arg0, %arg1 : i32, i32
  }
  func.func @transform_1(%arg0: i32, %arg1: i32) -> (i32, i32) {
    %c0_i32 = arith.constant 0 : i32
    return %arg0, %arg1 : i32, i32
  }
  func.func @transform_2(%arg0: i32, %arg1: i32) -> (i32, i32) {
    %c0_i32 = arith.constant 0 : i32
    return %arg0, %arg1 : i32, i32
  }
}

</mosaic_0001>

<llo_original>
// kernel: tpu_custom_call.1
$region0: #{tpu_custom_call.1}
  #allocation0 [shape = 'u32[]', space=smem, size = 0x4, offset = 0x4, fixed_abs, tag = 'smem constant byte address 0x4 - core index']
  #allocation1 [shape = 'u32[144,128]{1,0:T(1,128)}', space=vmem, size = 0x12000, scoped, tag = 'internal scratch']
  %s0 = inlined_call_operand.hbm [shape: f32[8,512], index: 0, kind: input, shape index: {}]
  %s1 = inlined_call_operand.hbm [shape: f32[8,512], index: 1, kind: input, shape index: {}]
  %s2 = inlined_call_operand.hbm [shape: f32[8,512], index: 2, kind: output, shape index: {}]
  %s3 = sld [smem:[#allocation0]]
  $region26: #{tpu_custom_call.1} parent=0
    _
  %s5 = ssub.s32 1, %s3
  %s6 = scalar_select 0, %s5, %s3
  $region1: #{tpu_custom_call.1} parent=0
    #allocation2 [shape = 'u8[16384]{0}', space=vmem, size = 0x4000, scoped, tag = 'input window, operand 0, single buffered']
    #allocation3 [shape = 's32[1]{0}', space=sflag, size = 0x4, scoped, tag = 'scoped memory for tpu_custom_call.1']
    #allocation4 [shape = 's32[1]{0}', space=sflag, size = 0x4, scoped, tag = 'scoped memory for tpu_custom_call.1']
    #allocation5 [shape = 'u8[16384]{0}', space=vmem, size = 0x4000, scoped, tag = 'input window, operand 1, single buffered']
    #allocation6 [shape = 's32[1]{0}', space=sflag, size = 0x4, scoped, tag = 'scoped memory for tpu_custom_call.1']
    #allocation7 [shape = 'u8[16384]{0}', space=vmem, size = 0x4000, scoped, tag = 'output window, operand 0, single buffered']
    %7 = vsyncpa [#allocation3], 0
    %8 = vsyncpa [#allocation6], 0
    %9 = vsyncpa [#allocation4], 0
    // Predicated region
    $region2: #{tpu_custom_call.1} parent=1 // pred_check
      _
    $region3: #{tpu_custom_call.1} parent=1 // pred_check_branch
      %11 = sbr.rel (0) target = $region5
    $region4: #{tpu_custom_call.1} parent=1 // pred_region
      %s13 = ssub.s32 512, 512
      %14 = vsyncadd [#allocation3], %s13
      %s16 = sshll.u32 [#allocation2], 4
      %s17 = int_to_ptr.vmem [resolvable:$true] %s16
      %19 = dma.hbm_to_vmem [thread:$0]  %s0, 512, %s17, [#allocation3]
    $region5: #{tpu_custom_call.1} parent=1 // pred_fallthru
      _
    // Predicated region
    $region6: #{tpu_custom_call.1} parent=1 // pred_check
      _
    $region7: #{tpu_custom_call.1} parent=1 // pred_check_branch
      %21 = sbr.rel (0) target = $region9
    $region8: #{tpu_custom_call.1} parent=1 // pred_region
      %s23 = ssub.s32 512, 512
      %24 = vsyncadd [#allocation6], %s23
      %s26 = sshll.u32 [#allocation5], 4
      %s27 = int_to_ptr.vmem [resolvable:$true] %s26
      %29 = dma.hbm_to_vmem [thread:$0]  %s1, 512, %s27, [#allocation6]
    $region9: #{tpu_custom_call.1} parent=1 // pred_fallthru
      _
    // Predicated region
    $region10: #{tpu_custom_call.1} parent=1 // pred_check
      _
    $region11: #{tpu_custom_call.1} parent=1 // pred_check_branch
      %31 = sbr.rel (0) target = $region13
    $region12: #{tpu_custom_call.1} parent=1 // pred_region
      %32 = dma.done [#allocation3], 512
    $region13: #{tpu_custom_call.1} parent=1 // pred_fallthru
      _
    // Predicated region
    $region14: #{tpu_custom_call.1} parent=1 // pred_check
      _
    $region15: #{tpu_custom_call.1} parent=1 // pred_check_branch
      %34 = sbr.rel (0) target = $region17
    $region16: #{tpu_custom_call.1} parent=1 // pred_region
      %35 = dma.done [#allocation6], 512
    $region17: #{tpu_custom_call.1} parent=1 // pred_fallthru
      _
    %v36 = vld [vmem:[#allocation5] sm:$0xff]
    %v37 = vld [vmem:[#allocation5 + $0x8] sm:$0xff]
    %v38 = vld [vmem:[#allocation5 + $0x10] sm:$0xff]
    %v39 = vld [vmem:[#allocation5 + $0x18] sm:$0xff]
    %v40 = vmul.f32 %v36, 3.1415927
    %v41 = vmul.f32 %v37, 3.1415927
    %v42 = vmul.f32 %v38, 3.1415927
    %v43 = vmul.f32 %v39, 3.1415927
    %v44 = vand.u32 2147483647, %v40
    %vm45 = vcmp.le.f32.partialorder %v44, 0.7853982
    %vm46 = vcmp.lt.s32.totalorder %v40, 0
    %v47 = vand.u32 %v40, 2139095040
    %v48 = vshrl.u32 %v47, 23
    %v49 = vsub.s32 %v48, 127
    %v50 = vand.u32 2147483647, %v40
    %v51 = vand.u32 %v50, 8388607
    %v52 = vor.u32 %v51, 8388608
    %v53 = vsub.s32 0, %v52
    %v54 = vadd.s32 %v49, 1
    %vm55 = vcmp.gt.s32.totalorder %v54, 0
    %v56 = vsel %vm55, %v54, 0
    %v57 = vshrl.u32 %v56, 5
    %v58 = vand.u32 %v56, 31
    %v59 = vsub.s32 32, %v58
    %v60 = vshrl.u32 683565275, %v59
    %v61 = vshll.u32 683565275, %v58
    %v62 = vshrl.u32 2475754826, %v59
    %v63 = vor.u32 %v61, %v62
    %v64 = vshll.u32 2475754826, %v58
    %v65 = vshrl.u32 2131351028, %v59
    %v66 = vor.u32 %v64, %v65
    %v67 = vshll.u32 2131351028, %v58
    %v68 = vshrl.u32 2102212464, %v59
    %v69 = vor.u32 %v67, %v68
    %v70 = vshll.u32 2102212464, %v58
    %v71 = vshrl.u32 920167782, %v59
    %v72 = vor.u32 %v70, %v71
    %v73 = vshll.u32 920167782, %v58
    %v74 = vshrl.u32 1326507024, %v59
    %v75 = vor.u32 %v73, %v74
    %vm76 = vcmp.lt.s32.totalorder %v57, 1
    %vm77 = vcmp.lt.s32.totalorder %v57, 2
    %vm78 = vcmp.lt.s32.totalorder %v57, 3
    %vm79 = vcmp.lt.s32.totalorder %v57, 4
    %v80 = vsel %vm76, %v60, %v63
    %v81 = vsel %vm79, %v69, 2102212464
    %v82 = vsel %vm78, %v66, %v81
    %v83 = vsel %vm77, %v80, %v82
    %v84 = vsel %vm76, %v63, %v66
    %v85 = vsel %vm79, %v72, 920167782
    %v86 = vsel %vm78, %v69, %v85
    %v87 = vsel %vm77, %v84, %v86
    %v88 = vsel %vm76, %v66, %v69
    %v89 = vsel %vm79, %v75, 1326507024
    %v90 = vsel %vm78, %v72, %v89
    %v91 = vsel %vm77, %v88, %v90
    %v92 = vshll.u32 %v52, 8
    %v93 = vmul.u32.u64.compose %v92, %v91
    %v94 = vextract.low.u32 %v93
    %v95 = vextract.high.u32 %v93
    %v96 = vmul.u32.u64.compose %v92, %v87
    %v97 = vextract.low.u32 %v96
    %v98 = vextract.high.u32 %v96
    %v99 = vmul.u32 %v92, %v83
    %v100 = vadd.s32 %v95, %v97
    %vm101 = vc.u32 %v95, %v97
    %v102 = vadd.s32 %v98, 1
    %v103 = vsel %vm101, %v102, %v98
    %v104 = vadd.s32 %v99, %v103
    %v105 = vadd.s32 %v104, 536870912
    %v106 = vshrl.u32 %v105, 30
    %v107 = vshll.u32 %v106, 30
    %v108 = vsub.s32 %v104, %v107
    %vm109 = vcmp.lt.s32.totalorder %v108, 0
    %v110 = vsub.s32 0, %v108
    %v111 = vsel %vm109, %v110, %v108
    %v112 = vclz %v111
    %v113 = vsub.s32 %v112, 2
    %vm114 = vcmp.gt.s32.totalorder 0, %v113
    %v115 = vsel %vm114, 0, %v113
    %v116 = vsub.s32 32, %v115
    %v117 = vshll.u32 %v108, %v115
    %v118 = vshrl.u32 %v100, %v116
    %v119 = vor.u32 %v117, %v118
    %v120 = vsub.s32 4294967266, %v115
    %v121 = vadd.s32 %v120, 127
    %v122 = vshll.u32 %v121, 23
    %v123 = vor.u32 4788187, %v122
    %v124 = vand.u32 2147483647, %v123
    %v126 = vcvt.s32.f32 %v119
    %v127 = vmul.f32 %v126, %v124
    %v128 = vxor.u32 %v127, 2147483648
    %v129 = vsel %vm46, %v128, %v127
    %v130 = vsub.s32 4, %v106
    %v131 = vsel %vm46, %v130, %v106
    %v132 = vsel %vm45, %v40, %v129
    %v133 = vsel %vm45, 0, %v131
    %v134 = vcosq.f32.pop %v132
    %v135 = vsinq.f32.pop %v132
    %vm136 = vweird.f32 %v40
    %v137 = vadd.s32 %v133, 3
    %v138 = vand.u32 %v137, 3
    %vm139 = vcmp.lt.s32.totalorder %v138, 2
    %vm140 = vcmp.eq.s32.totalorder %v138, 0
    %v141 = vxor.u32 %v135, 2147483648
    %v142 = vsel %vm140, %v134, %v141
    %vm143 = vcmp.eq.s32.totalorder %v138, 2
    %v144 = vxor.u32 %v134, 2147483648
    %v145 = vsel %vm143, %v144, %v135
    %v146 = vsel %vm139, %v142, %v145
    %v147 = vsel %vm136, nan, %v146
    %v148 = vand.u32 2147483647, %v41
    %vm149 = vcmp.le.f32.partialorder %v148, 0.7853982
    %vm150 = vcmp.lt.s32.totalorder %v41, 0
    %v151 = vand.u32 %v41, 2139095040
    %v152 = vshrl.u32 %v151, 23
    %v153 = vsub.s32 %v152, 127
    %v154 = vand.u32 2147483647, %v41
    %v155 = vand.u32 %v154, 8388607
    %v156 = vor.u32 %v155, 8388608
    %v157 = vsub.s32 0, %v156
    %v158 = vadd.s32 %v153, 1
    %vm159 = vcmp.gt.s32.totalorder %v158, 0
    %v160 = vsel %vm159, %v158, 0
    %v161 = vshrl.u32 %v160, 5
    %v162 = vand.u32 %v160, 31
    %v163 = vsub.s32 32, %v162
    %v164 = vshrl.u32 683565275, %v163
    %v165 = vshll.u32 683565275, %v162
    %v166 = vshrl.u32 2475754826, %v163
    %v167 = vor.u32 %v165, %v166
    %v168 = vshll.u32 2475754826, %v162
    %v169 = vshrl.u32 2131351028, %v163
    %v170 = vor.u32 %v168, %v169
    %v171 = vshll.u32 2131351028, %v162
    %v172 = vshrl.u32 2102212464, %v163
    %v173 = vor.u32 %v171, %v172
    %v174 = vshll.u32 2102212464, %v162
    %v175 = vshrl.u32 920167782, %v163
    %v176 = vor.u32 %v174, %v175
    %v177 = vshll.u32 920167782, %v162
    %v178 = vshrl.u32 1326507024, %v163
    %v179 = vor.u32 %v177, %v178
    %vm180 = vcmp.lt.s32.totalorder %v161, 1
    %vm181 = vcmp.lt.s32.totalorder %v161, 2
    %vm182 = vcmp.lt.s32.totalorder %v161, 3
    %vm183 = vcmp.lt.s32.totalorder %v161, 4
    %v184 = vsel %vm180, %v164, %v167
    %v185 = vsel %vm183, %v173, 2102212464
    %v186 = vsel %vm182, %v170, %v185
    %v187 = vsel %vm181, %v184, %v186
    %v188 = vsel %vm180, %v167, %v170
    %v189 = vsel %vm183, %v176, 920167782
    %v190 = vsel %vm182, %v173, %v189
    %v191 = vsel %vm181, %v188, %v190
    %v192 = vsel %vm180, %v170, %v173
    %v193 = vsel %vm183, %v179, 1326507024
    %v194 = vsel %vm182, %v176, %v193
    %v195 = vsel %vm181, %v192, %v194
    %v196 = vshll.u32 %v156, 8
    %v197 = vmul.u32.u64.compose %v196, %v195
    %v198 = vextract.low.u32 %v197
    %v199 = vextract.high.u32 %v197
    %v200 = vmul.u32.u64.compose %v196, %v191
    %v201 = vextract.low.u32 %v200
    %v202 = vextract.high.u32 %v200
    %v203 = vmul.u32 %v196, %v187
    %v204 = vadd.s32 %v199, %v201
    %vm205 = vc.u32 %v199, %v201
    %v206 = vadd.s32 %v202, 1
    %v207 = vsel %vm205, %v206, %v202
    %v208 = vadd.s32 %v203, %v207
    %v209 = vadd.s32 %v208, 536870912
    %v210 = vshrl.u32 %v209, 30
    %v211 = vshll.u32 %v210, 30
    %v212 = vsub.s32 %v208, %v211
    %vm213 = vcmp.lt.s32.totalorder %v212, 0
    %v214 = vsub.s32 0, %v212
    %v215 = vsel %vm213, %v214, %v212
    %v216 = vclz %v215
    %v217 = vsub.s32 %v216, 2
    %vm218 = vcmp.gt.s32.totalorder 0, %v217
    %v219 = vsel %vm218, 0, %v217
    %v220 = vsub.s32 32, %v219
    %v221 = vshll.u32 %v212, %v219
    %v222 = vshrl.u32 %v204, %v220
    %v223 = vor.u32 %v221, %v222
    %v224 = vsub.s32 4294967266, %v219
    %v225 = vadd.s32 %v224, 127
    %v226 = vshll.u32 %v225, 23
    %v227 = vor.u32 4788187, %v226
    %v228 = vand.u32 2147483647, %v227
    %v230 = vcvt.s32.f32 %v223
    %v231 = vmul.f32 %v230, %v228
    %v232 = vxor.u32 %v231, 2147483648
    %v233 = vsel %vm150, %v232, %v231
    %v234 = vsub.s32 4, %v210
    %v235 = vsel %vm150, %v234, %v210
    %v236 = vsel %vm149, %v41, %v233
    %v237 = vsel %vm149, 0, %v235
    %v238 = vcosq.f32.pop %v236
    %v239 = vsinq.f32.pop %v236
    %vm240 = vweird.f32 %v41
    %v241 = vadd.s32 %v237, 3
    %v242 = vand.u32 %v241, 3
    %vm243 = vcmp.lt.s32.totalorder %v242, 2
    %vm244 = vcmp.eq.s32.totalorder %v242, 0
    %v245 = vxor.u32 %v239, 2147483648
    %v246 = vsel %vm244, %v238, %v245
    %vm247 = vcmp.eq.s32.totalorder %v242, 2
    %v248 = vxor.u32 %v238, 2147483648
    %v249 = vsel %vm247, %v248, %v239
    %v250 = vsel %vm243, %v246, %v249
    %v251 = vsel %vm240, nan, %v250
    %v252 = vand.u32 2147483647, %v42
    %vm253 = vcmp.le.f32.partialorder %v252, 0.7853982
    %vm254 = vcmp.lt.s32.totalorder %v42, 0
    %v255 = vand.u32 %v42, 2139095040
    %v256 = vshrl.u32 %v255, 23
    %v257 = vsub.s32 %v256, 127
    %v258 = vand.u32 2147483647, %v42
    %v259 = vand.u32 %v258, 8388607
    %v260 = vor.u32 %v259, 8388608
    %v261 = vsub.s32 0, %v260
    %v262 = vadd.s32 %v257, 1
    %vm263 = vcmp.gt.s32.totalorder %v262, 0
    %v264 = vsel %vm263, %v262, 0
    %v265 = vshrl.u32 %v264, 5
    %v266 = vand.u32 %v264, 31
    %v267 = vsub.s32 32, %v266
    %v268 = vshrl.u32 683565275, %v267
    %v269 = vshll.u32 683565275, %v266
    %v270 = vshrl.u32 2475754826, %v267
    %v271 = vor.u32 %v269, %v270
    %v272 = vshll.u32 2475754826, %v266
    %v273 = vshrl.u32 2131351028, %v267
    %v274 = vor.u32 %v272, %v273
    %v275 = vshll.u32 2131351028, %v266
    %v276 = vshrl.u32 2102212464, %v267
    %v277 = vor.u32 %v275, %v276
    %v278 = vshll.u32 2102212464, %v266
    %v279 = vshrl.u32 920167782, %v267
    %v280 = vor.u32 %v278, %v279
    %v281 = vshll.u32 920167782, %v266
    %v282 = vshrl.u32 1326507024, %v267
    %v283 = vor.u32 %v281, %v282
    %vm284 = vcmp.lt.s32.totalorder %v265, 1
    %vm285 = vcmp.lt.s32.totalorder %v265, 2
    %vm286 = vcmp.lt.s32.totalorder %v265, 3
    %vm287 = vcmp.lt.s32.totalorder %v265, 4
    %v288 = vsel %vm284, %v268, %v271
    %v289 = vsel %vm287, %v277, 2102212464
    %v290 = vsel %vm286, %v274, %v289
    %v291 = vsel %vm285, %v288, %v290
    %v292 = vsel %vm284, %v271, %v274
    %v293 = vsel %vm287, %v280, 920167782
    %v294 = vsel %vm286, %v277, %v293
    %v295 = vsel %vm285, %v292, %v294
    %v296 = vsel %vm284, %v274, %v277
    %v297 = vsel %vm287, %v283, 1326507024
    %v298 = vsel %vm286, %v280, %v297
    %v299 = vsel %vm285, %v296, %v298
    %v300 = vshll.u32 %v260, 8
    %v301 = vmul.u32.u64.compose %v300, %v299
    %v302 = vextract.low.u32 %v301
    %v303 = vextract.high.u32 %v301
    %v304 = vmul.u32.u64.compose %v300, %v295
    %v305 = vextract.low.u32 %v304
    %v306 = vextract.high.u32 %v304
    %v307 = vmul.u32 %v300, %v291
    %v308 = vadd.s32 %v303, %v305
    %vm309 = vc.u32 %v303, %v305
    %v310 = vadd.s32 %v306, 1
    %v311 = vsel %vm309, %v310, %v306
    %v312 = vadd.s32 %v307, %v311
    %v313 = vadd.s32 %v312, 536870912
    %v314 = vshrl.u32 %v313, 30
    %v315 = vshll.u32 %v314, 30
    %v316 = vsub.s32 %v312, %v315
    %vm317 = vcmp.lt.s32.totalorder %v316, 0
    %v318 = vsub.s32 0, %v316
    %v319 = vsel %vm317, %v318, %v316
    %v320 = vclz %v319
    %v321 = vsub.s32 %v320, 2
    %vm322 = vcmp.gt.s32.totalorder 0, %v321
    %v323 = vsel %vm322, 0, %v321
    %v324 = vsub.s32 32, %v323
    %v325 = vshll.u32 %v316, %v323
    %v326 = vshrl.u32 %v308, %v324
    %v327 = vor.u32 %v325, %v326
    %v328 = vsub.s32 4294967266, %v323
    %v329 = vadd.s32 %v328, 127
    %v330 = vshll.u32 %v329, 23
    %v331 = vor.u32 4788187, %v330
    %v332 = vand.u32 2147483647, %v331
    %v334 = vcvt.s32.f32 %v327
    %v335 = vmul.f32 %v334, %v332
    %v336 = vxor.u32 %v335, 2147483648
    %v337 = vsel %vm254, %v336, %v335
    %v338 = vsub.s32 4, %v314
    %v339 = vsel %vm254, %v338, %v314
    %v340 = vsel %vm253, %v42, %v337
    %v341 = vsel %vm253, 0, %v339
    %v342 = vcosq.f32.pop %v340
    %v343 = vsinq.f32.pop %v340
    %vm344 = vweird.f32 %v42
    %v345 = vadd.s32 %v341, 3
    %v346 = vand.u32 %v345, 3
    %vm347 = vcmp.lt.s32.totalorder %v346, 2
    %vm348 = vcmp.eq.s32.totalorder %v346, 0
    %v349 = vxor.u32 %v343, 2147483648
    %v350 = vsel %vm348, %v342, %v349
    %vm351 = vcmp.eq.s32.totalorder %v346, 2
    %v352 = vxor.u32 %v342, 2147483648
    %v353 = vsel %vm351, %v352, %v343
    %v354 = vsel %vm347, %v350, %v353
    %v355 = vsel %vm344, nan, %v354
    %v356 = vand.u32 2147483647, %v43
    %vm357 = vcmp.le.f32.partialorder %v356, 0.7853982
    %vm358 = vcmp.lt.s32.totalorder %v43, 0
    %v359 = vand.u32 %v43, 2139095040
    %v360 = vshrl.u32 %v359, 23
    %v361 = vsub.s32 %v360, 127
    %v362 = vand.u32 2147483647, %v43
    %v363 = vand.u32 %v362, 8388607
    %v364 = vor.u32 %v363, 8388608
    %v365 = vsub.s32 0, %v364
    %v366 = vadd.s32 %v361, 1
    %vm367 = vcmp.gt.s32.totalorder %v366, 0
    %v368 = vsel %vm367, %v366, 0
    %v369 = vshrl.u32 %v368, 5
    %v370 = vand.u32 %v368, 31
    %v371 = vsub.s32 32, %v370
    %v372 = vshrl.u32 683565275, %v371
    %v373 = vshll.u32 683565275, %v370
    %v374 = vshrl.u32 2475754826, %v371
    %v375 = vor.u32 %v373, %v374
    %v376 = vshll.u32 2475754826, %v370
    %v377 = vshrl.u32 2131351028, %v371
    %v378 = vor.u32 %v376, %v377
    %v379 = vshll.u32 2131351028, %v370
    %v380 = vshrl.u32 2102212464, %v371
    %v381 = vor.u32 %v379, %v380
    %v382 = vshll.u32 2102212464, %v370
    %v383 = vshrl.u32 920167782, %v371
    %v384 = vor.u32 %v382, %v383
    %v385 = vshll.u32 920167782, %v370
    %v386 = vshrl.u32 1326507024, %v371
    %v387 = vor.u32 %v385, %v386
    %vm388 = vcmp.lt.s32.totalorder %v369, 1
    %vm389 = vcmp.lt.s32.totalorder %v369, 2
    %vm390 = vcmp.lt.s32.totalorder %v369, 3
    %vm391 = vcmp.lt.s32.totalorder %v369, 4
    %v392 = vsel %vm388, %v372, %v375
    %v393 = vsel %vm391, %v381, 2102212464
    %v394 = vsel %vm390, %v378, %v393
    %v395 = vsel %vm389, %v392, %v394
    %v396 = vsel %vm388, %v375, %v378
    %v397 = vsel %vm391, %v384, 920167782
    %v398 = vsel %vm390, %v381, %v397
    %v399 = vsel %vm389, %v396, %v398
    %v400 = vsel %vm388, %v378, %v381
    %v401 = vsel %vm391, %v387, 1326507024
    %v402 = vsel %vm390, %v384, %v401
    %v403 = vsel %vm389, %v400, %v402
    %v404 = vshll.u32 %v364, 8
    %v405 = vmul.u32.u64.compose %v404, %v403
    %v406 = vextract.low.u32 %v405
    %v407 = vextract.high.u32 %v405
    %v408 = vmul.u32.u64.compose %v404, %v399
    %v409 = vextract.low.u32 %v408
    %v410 = vextract.high.u32 %v408
    %v411 = vmul.u32 %v404, %v395
    %v412 = vadd.s32 %v407, %v409
    %vm413 = vc.u32 %v407, %v409
    %v414 = vadd.s32 %v410, 1
    %v415 = vsel %vm413, %v414, %v410
    %v416 = vadd.s32 %v411, %v415
    %v417 = vadd.s32 %v416, 536870912
    %v418 = vshrl.u32 %v417, 30
    %v419 = vshll.u32 %v418, 30
    %v420 = vsub.s32 %v416, %v419
    %vm421 = vcmp.lt.s32.totalorder %v420, 0
    %v422 = vsub.s32 0, %v420
    %v423 = vsel %vm421, %v422, %v420
    %v424 = vclz %v423
    %v425 = vsub.s32 %v424, 2
    %vm426 = vcmp.gt.s32.totalorder 0, %v425
    %v427 = vsel %vm426, 0, %v425
    %v428 = vsub.s32 32, %v427
    %v429 = vshll.u32 %v420, %v427
    %v430 = vshrl.u32 %v412, %v428
    %v431 = vor.u32 %v429, %v430
    %v432 = vsub.s32 4294967266, %v427
    %v433 = vadd.s32 %v432, 127
    %v434 = vshll.u32 %v433, 23
    %v435 = vor.u32 4788187, %v434
    %v436 = vand.u32 2147483647, %v435
    %v438 = vcvt.s32.f32 %v431
    %v439 = vmul.f32 %v438, %v436
    %v440 = vxor.u32 %v439, 2147483648
    %v441 = vsel %vm358, %v440, %v439
    %v442 = vsub.s32 4, %v418
    %v443 = vsel %vm358, %v442, %v418
    %v444 = vsel %vm357, %v43, %v441
    %v445 = vsel %vm357, 0, %v443
    %v446 = vcosq.f32.pop %v444
    %v447 = vsinq.f32.pop %v444
    %vm448 = vweird.f32 %v43
    %v449 = vadd.s32 %v445, 3
    %v450 = vand.u32 %v449, 3
    %vm451 = vcmp.lt.s32.totalorder %v450, 2
    %vm452 = vcmp.eq.s32.totalorder %v450, 0
    %v453 = vxor.u32 %v447, 2147483648
    %v454 = vsel %vm452, %v446, %v453
    %vm455 = vcmp.eq.s32.totalorder %v450, 2
    %v456 = vxor.u32 %v446, 2147483648
    %v457 = vsel %vm455, %v456, %v447
    %v458 = vsel %vm451, %v454, %v457
    %v459 = vsel %vm448, nan, %v458
    %v460 = vld [vmem:[#allocation2] sm:$0xff]
    %v461 = vld [vmem:[#allocation2 + $0x8] sm:$0xff]
    %v462 = vld [vmem:[#allocation2 + $0x10] sm:$0xff]
    %v463 = vld [vmem:[#allocation2 + $0x18] sm:$0xff]
    %v464 = vmul.f32 %v460, -9.869604
    %v465 = vmul.f32 %v461, -9.869604
    %v466 = vmul.f32 %v462, -9.869604
    %v467 = vmul.f32 %v463, -9.869604
    %v468 = vmul.f32 %v464, 1.442695
    %v469 = vpow.pop %v468
    %v470 = vmul.f32 %v465, 1.442695
    %v471 = vpow.pop %v470
    %v472 = vmul.f32 %v466, 1.442695
    %v473 = vpow.pop %v472
    %v474 = vmul.f32 %v467, 1.442695
    %v475 = vpow.pop %v474
    %v476 = vmul.f32 %v147, %v469
    %v477 = vmul.f32 %v251, %v471
    %v478 = vmul.f32 %v355, %v473
    %v479 = vmul.f32 %v459, %v475
    %480 = vst [vmem:[#allocation7] sm:$0xff] %v476
    %481 = vst [vmem:[#allocation7 + $0x8] sm:$0xff] %v477
    %482 = vst [vmem:[#allocation7 + $0x10] sm:$0xff] %v478
    %483 = vst [vmem:[#allocation7 + $0x18] sm:$0xff] %v479
    // Predicated region
    $region18: #{tpu_custom_call.1} parent=1 // pred_check
      _
    $region19: #{tpu_custom_call.1} parent=1 // pred_check_branch
      %485 = sbr.rel (0) target = $region21
    $region20: #{tpu_custom_call.1} parent=1 // pred_region
      %s487 = ssub.s32 512, 512
      %488 = vsyncadd [#allocation4], %s487
      %s490 = sshll.u32 [#allocation7], 4
      %s491 = int_to_ptr.vmem [resolvable:$true] %s490
      %493 = dma.vmem_to_hbm [thread:$0]  %s491, 512, %s2, [#allocation4]
    $region21: #{tpu_custom_call.1} parent=1 // pred_fallthru
      _
    // Predicated region
    $region22: #{tpu_custom_call.1} parent=1 // pred_check
      _
    $region23: #{tpu_custom_call.1} parent=1 // pred_check_branch
      %495 = sbr.rel (0) target = $region25
    $region24: #{tpu_custom_call.1} parent=1 // pred_region
      %496 = dma.done [#allocation4], 512
    $region25: #{tpu_custom_call.1} parent=1 // pred_fallthru
      _
    %497 = vsyncpa [#allocation3], 1
    %498 = vsyncpa [#allocation6], 1
    %499 = vsyncpa [#allocation4], 1

</llo_original>
